<compile_context>
chip_gen: v7x
topology: tpu7x:2x2x1
jax: 0.10.0
libtpu: 0.0.40
codegen_flags: <defaults>
</compile_context>

<pallas_src>
import functools

import jax
import jax.numpy as jnp
from jax.experimental import pallas as pl
from jax.experimental.pallas import tpu as pltpu

_F_PAD = 128  # lane-dense padding of the conv-filter (output-channel) axis


def _cnn_kernel(valid_lens, max_k, f_pad,
                emb_ref, w_ref, b_ref, fc_w_ref, fc_b_ref, out_ref):
    """One batch tile of the SentimentAnalysisCNN forward.

    emb_ref : (TB, L, E)      bf16 embedded activations (time on sublanes,
                              time zero-padded to a multiple of 8).
    w_ref   : (max_k, E, NF)  bf16 stacked conv weights, NF = n_k * f_pad;
                              branch kk lives in lanes [kk*f_pad, kk*f_pad+F);
                              taps j >= k_kk and padded filter lanes are zero.
    b_ref   : (1, NF)         f32 stacked conv bias (zero in padded lanes).
    fc_w_ref: (NF, C_pad)     f32 lane/class-padded FC weight.
    fc_b_ref: (1, C_pad)      f32 FC bias (zero in padded class lanes).
    out_ref : (TB, C_pad)     f32 sigmoid(logits), lane-dense store.
    """
    n_k = len(valid_lens)
    TB, L, E = emb_ref.shape
    NF = n_k * f_pad

    emb = emb_ref[...]                       # (TB, L, E) bf16, straight to MXU
    emb_f32 = emb.astype(jnp.float32)        # 32-bit view for the sublane rolls

    # Conv1d (valid, stride 1) for all kernel sizes at once: one MXU matmul
    # per tap against the lane-stacked weight.  The time realignment is a
    # sublane roll of the *input* (E lanes wide, XLU slot, overlaps the next
    # matmul), not of the f32 (NF-wide) partial product.
    acc = jnp.einsum("ble,ef->blf", emb, w_ref[0],
                     preferred_element_type=jnp.float32)          # (TB, L, NF)
    for j in range(1, max_k):
        shifted = pltpu.roll(emb_f32, shift=(L - j) % L, axis=1)
        acc = acc + jnp.einsum("ble,ef->blf", shifted.astype(jnp.bfloat16),
                               w_ref[j], preferred_element_type=jnp.float32)

    # Kill time steps past each branch's valid conv length (the wrapped roll
    # tail and the seq-len zero padding) with a large negative so they never
    # win the max-pool.
    t_idx = jax.lax.broadcasted_iota(jnp.int32, (L, NF), 0)
    lane_idx = jax.lax.broadcasted_iota(jnp.int32, (L, NF), 1)
    l_valid = jnp.full((L, NF), valid_lens[0], jnp.int32)
    for kk in range(1, n_k):
        l_valid = jnp.where(lane_idx >= kk * f_pad, valid_lens[kk], l_valid)
    acc = jnp.where((t_idx < l_valid)[None, :, :], acc, jnp.float32(-1e30))

    # Max-pool over time FIRST, then bias + ReLU (both commute with the max):
    # two (TB, L, NF) f32 VPU passes shrink to (TB, NF).
    pooled = jnp.max(acc, axis=1)                                  # (TB, NF)
    pooled = jnp.maximum(pooled + b_ref[...], 0.0)

    # dropout -> identity (inference).  Padded filter lanes are zero on both
    # sides; padded class lanes carry zero weight/bias and are sliced off in
    # the wrapper, so the store stays a full-128-lane tile (no vst.msk).
    logits = jnp.dot(pooled, fc_w_ref[...],
                     preferred_element_type=jnp.float32)           # (TB, C_pad)
    logits = logits + fc_b_ref[...]
    out_ref[...] = jax.nn.sigmoid(logits).astype(out_ref.dtype)


def _vmem_capacity_bytes():
    try:
        return int(pltpu.get_tpu_info().vmem_capacity_bytes)
    except Exception:
        return 64 * 1024 * 1024   # conservative fallback = v7x physical VMEM


def _estimate_vmem(tb, *, L, E, NF, c_pad, w_bytes):
    """Rough live-VMEM estimate for one batch tile of this kernel."""
    emb_in = 2 * tb * L * E * 2           # bf16 activation tile, double-buffered
    emb_tmp = tb * L * E * (4 + 4 + 2)    # f32 copy + rolled f32 + bf16 repack
    acc = 3 * tb * L * NF * 4             # acc + per-tap product + masked copy
    out = 2 * tb * c_pad * 4              # f32 output tile, double-buffered
    return emb_in + emb_tmp + acc + out + w_bytes


def _pick_batch_tile(B, est, budget):
    """Largest batch tile that (a) fits the VMEM budget, (b) leaves >= 2 grid
    steps whenever B allows it (shards the grid across v7x's two TensorCores
    and keeps the activation-DMA pipeline busy), (c) stays sublane-aligned."""
    if B <= 8:
        return B
    tb = -(-B // 8) * 8
    if B >= 16:
        half = -(-B // 2)
        tb = min(tb, -(-half // 8) * 8)
    while tb > 8 and est(tb) > budget:
        tb -= 8
    return max(tb, 8)


def sentiment_cnn_forward(token_ids, params, kernel_sizes, num_filters,
                          num_classes):
    """token_ids: (B, L) int32. Returns sigmoid(fc(...)) with torch-style squeeze."""
    kernel_sizes = tuple(kernel_sizes)
    n_k = len(kernel_sizes)
    max_k = max(kernel_sizes)
    f_pad = -(-num_filters // _F_PAD) * _F_PAD     # filters -> full 128-lane tiles
    NF = n_k * f_pad
    c_pad = -(-num_classes // _F_PAD) * _F_PAD     # lane-dense logits/output

    B, L = token_ids.shape
    assert L >= max_k, "seq_len must be >= max(kernel_sizes) for a valid conv"

    emb_table = params["embedding"]                             # (V, E)
    E = emb_table.shape[1]
    emb = jnp.take(emb_table, token_ids, axis=0).astype(jnp.bfloat16)   # (B,L,E)

    # Pad the time axis to the f32 sublane tile so rolls and the time-axis
    # reduction stay unmasked single ops for general L (v5e is most sensitive);
    # demo L=8 is unchanged.  Padded rows are masked before the max-pool.
    L_pad = -(-L // 8) * 8
    if L_pad != L:
        emb = jnp.pad(emb, ((0, 0), (0, L_pad - L), (0, 0)))

    # Stack + lane-pad conv weights/bias: branch kk -> lanes [kk*f_pad, ...).
    W = jnp.zeros((max_k, E, NF), jnp.float32)
    b_vec = jnp.zeros((1, NF), jnp.float32)
    for kk, k in enumerate(kernel_sizes):
        W = W.at[:k, :, kk * f_pad:kk * f_pad + num_filters].set(
            params[f"conv_w_{kk}"])
        b_vec = b_vec.at[0, kk * f_pad:kk * f_pad + num_filters].set(
            params[f"conv_b_{kk}"])
    W = W.astype(jnp.bfloat16)

    # FC weight -> (NF, c_pad): rows follow the padded pooled-feature layout,
    # classes zero-padded to a full 128-lane output tile.
    fc_w = jnp.zeros((NF, c_pad), jnp.float32)
    for kk in range(n_k):
        fc_w = fc_w.at[kk * f_pad:kk * f_pad + num_filters, :num_classes].set(
            params["fc_w"][:, kk * num_filters:(kk + 1) * num_filters].T)
    fc_b = jnp.zeros((1, c_pad), jnp.float32)
    fc_b = fc_b.at[0, :num_classes].set(params["fc_b"].astype(jnp.float32))

    # VMEM budget / batch tile: capacity-derived limit, weights counted as
    # double-buffered, >=2 grid steps when the batch allows it.
    vmem_cap = _vmem_capacity_bytes()
    vmem_limit = min((vmem_cap * 3) // 4, 96 * 1024 * 1024)
    w_bytes = 2 * (W.size * 2 + b_vec.size * 4 + fc_w.size * 4 + fc_b.size * 4)
    est = functools.partial(_estimate_vmem, L=L_pad, E=E, NF=NF,
                            c_pad=c_pad, w_bytes=w_bytes)
    TB = _pick_batch_tile(B, est, budget=(vmem_limit * 4) // 5)
    nb = pl.cdiv(B, TB)
    B_pad = nb * TB
    if B_pad != B:
        emb = jnp.pad(emb, ((0, B_pad - B), (0, 0), (0, 0)))

    valid_lens = tuple(L - k + 1 for k in kernel_sizes)   # per-branch L_out
    kernel = functools.partial(_cnn_kernel, valid_lens, max_k, f_pad)

    out = pl.pallas_call(
        kernel,
        out_shape=jax.ShapeDtypeStruct((B_pad, c_pad), jnp.float32),
        grid=(nb,),
        in_specs=[
            pl.BlockSpec((TB, L_pad, E), lambda i: (i, 0, 0)),     # pipelined acts
            pl.BlockSpec((max_k, E, NF), lambda i: (0, 0, 0)),     # resident weights
            pl.BlockSpec((1, NF), lambda i: (0, 0)),
            pl.BlockSpec((NF, c_pad), lambda i: (0, 0)),
            pl.BlockSpec((1, c_pad), lambda i: (0, 0)),
        ],
        out_specs=pl.BlockSpec((TB, c_pad), lambda i: (i, 0)),
        compiler_params=pltpu.CompilerParams(
            dimension_semantics=("parallel",),
            vmem_limit_bytes=int(vmem_limit)),
    )(emb, W, b_vec, fc_w, fc_b)

    out = out[:B, :num_classes]
    # torch.sigmoid(x).squeeze(): drops the class dim (and batch dim if B == 1).
    return jnp.squeeze(out)


def init_params(key, vocab_size, embedding_dim, kernel_sizes, num_filters,
                num_classes):
    keys = jax.random.split(key, 2 + 2 * len(kernel_sizes) + 2)
    params = {}
    emb = 0.1 * jax.random.normal(keys[0], (vocab_size, embedding_dim),
                                  jnp.float32)
    emb = emb.at[1].set(0.0)  # padding_idx=1 -> zero row
    params["embedding"] = emb
    for idx, k in enumerate(kernel_sizes):
        # (k, E, F) = PyTorch Conv1d weight (F, E, k) permuted to (tap, in, out).
        params[f"conv_w_{idx}"] = 0.1 * jax.random.normal(
            keys[1 + 2 * idx], (k, embedding_dim, num_filters), jnp.float32)
        params[f"conv_b_{idx}"] = 0.01 * jax.random.normal(
            keys[2 + 2 * idx], (num_filters,), jnp.float32)
    params["fc_w"] = 0.1 * jax.random.normal(
        keys[-2], (num_classes, len(kernel_sizes) * num_filters), jnp.float32)
    params["fc_b"] = 0.01 * jax.random.normal(
        keys[-1], (num_classes,), jnp.float32)
    return params


if __name__ == "__main__":
    vocab_size = 50
    embedding_dim = 32
    kernel_sizes = [3, 4, 5]
    num_filters = 16
    num_classes = 1
    batch, seq_len = 2, 8

    key = jax.random.PRNGKey(0)
    k_param, k_tok = jax.random.split(key)
    params = init_params(k_param, vocab_size, embedding_dim, kernel_sizes,
                         num_filters, num_classes)
    token_ids = jax.random.randint(k_tok, (batch, seq_len), 0, vocab_size,
                                   dtype=jnp.int32)

    out = sentiment_cnn_forward(token_ids, params, kernel_sizes, num_filters,
                                num_classes)
    out = jax.block_until_ready(out)
    assert out.shape == (batch,)
    assert bool(jnp.all(jnp.isfinite(out)))
    assert bool(jnp.all((out >= 0.0) & (out <= 1.0)))
    print("KERNEL_OK")
</pallas_src>

<mosaic_0001>
module attributes {stable_mosaic.version = 11 : i64} {
  func.func @_cnn_kernel(%arg0: i32, %arg1: memref<2x8x32xbf16, #tpu.memory_space<vmem>>, %arg2: memref<5x32x384xbf16, #tpu.memory_space<vmem>>, %arg3: memref<1x384xf32, #tpu.memory_space<vmem>>, %arg4: memref<384x128xf32, #tpu.memory_space<vmem>>, %arg5: memref<1x128xf32, #tpu.memory_space<vmem>>, %arg6: memref<2x128xf32, #tpu.memory_space<vmem>>) attributes {dimension_semantics = [#tpu.dimension_semantics<parallel>], iteration_bounds = array<i64: 1>, scalar_prefetch = 0 : i64, scratch_operands = 0 : i64, tpu.core_type = #tpu.core_type<tc>, window_params = [{transform_indices = @transform_0, window_bounds = array<i64: 2, 8, 32>}, {pipeline_mode = #tpu.pipeline_mode<synchronous>, transform_indices = @transform_1, window_bounds = array<i64: 5, 32, 384>}, {pipeline_mode = #tpu.pipeline_mode<synchronous>, transform_indices = @transform_2, window_bounds = array<i64: 1, 384>}, {pipeline_mode = #tpu.pipeline_mode<synchronous>, transform_indices = @transform_3, window_bounds = array<i64: 384, 128>}, {pipeline_mode = #tpu.pipeline_mode<synchronous>, transform_indices = @transform_4, window_bounds = array<i64: 1, 128>}, {transform_indices = @transform_5, window_bounds = array<i64: 2, 128>}]} {
    %c0 = arith.constant 0 : index
    %c0_0 = arith.constant 0 : index
    %c0_1 = arith.constant 0 : index
    %0 = vector.load %arg1[%c0, %c0_0, %c0_1] : memref<2x8x32xbf16, #tpu.memory_space<vmem>>, vector<2x8x32xbf16>
    %1 = arith.extf %0 : vector<2x8x32xbf16> to vector<2x8x32xf32>
    %c0_2 = arith.constant 0 : index
    %c0_3 = arith.constant 0 : index
    %c0_4 = arith.constant 0 : index
    %2 = vector.load %arg2[%c0_2, %c0_3, %c0_4] : memref<5x32x384xbf16, #tpu.memory_space<vmem>>, vector<1x32x384xbf16>
    %3 = vector.shape_cast %2 : vector<1x32x384xbf16> to vector<32x384xbf16>
    "tpu.trace_start"() <{level = 10 : i32, message = "ble,ef->blf"}> : () -> ()
    %cst = arith.constant dense<0.000000e+00> : vector<2x8x384xf32>
    %4 = tpu.matmul %0, %3, %cst {dimension_numbers = #tpu.dot_dimension_numbers<[2], [0], [0, 1], [1], [0, 0, 0, 1, 1, 1], [], []>} : vector<2x8x32xbf16>, vector<32x384xbf16>, vector<2x8x384xf32> -> vector<2x8x384xf32>
    %c7_i32 = arith.constant 7 : i32
    "tpu.trace_stop"() : () -> ()
    %5 = tpu.dynamic_rotate %1 by %c7_i32 dim 1 : vector<2x8x32xf32>, i32 -> vector<2x8x32xf32>
    %6 = arith.truncf %5 : vector<2x8x32xf32> to vector<2x8x32xbf16>
    %c1 = arith.constant 1 : index
    %c0_5 = arith.constant 0 : index
    %c0_6 = arith.constant 0 : index
    %7 = vector.load %arg2[%c1, %c0_5, %c0_6] : memref<5x32x384xbf16, #tpu.memory_space<vmem>>, vector<1x32x384xbf16>
    %8 = vector.shape_cast %7 : vector<1x32x384xbf16> to vector<32x384xbf16>
    "tpu.trace_start"() <{level = 10 : i32, message = "ble,ef->blf"}> : () -> ()
    %cst_7 = arith.constant dense<0.000000e+00> : vector<2x8x384xf32>
    %9 = tpu.matmul %6, %8, %cst_7 {dimension_numbers = #tpu.dot_dimension_numbers<[2], [0], [0, 1], [1], [0, 0, 0, 1, 1, 1], [], []>} : vector<2x8x32xbf16>, vector<32x384xbf16>, vector<2x8x384xf32> -> vector<2x8x384xf32>
    "tpu.trace_stop"() : () -> ()
    %10 = arith.addf %4, %9 : vector<2x8x384xf32>
    %c6_i32 = arith.constant 6 : i32
    %11 = tpu.dynamic_rotate %1 by %c6_i32 dim 1 : vector<2x8x32xf32>, i32 -> vector<2x8x32xf32>
    %12 = arith.truncf %11 : vector<2x8x32xf32> to vector<2x8x32xbf16>
    %c2 = arith.constant 2 : index
    %c0_8 = arith.constant 0 : index
    %c0_9 = arith.constant 0 : index
    %13 = vector.load %arg2[%c2, %c0_8, %c0_9] : memref<5x32x384xbf16, #tpu.memory_space<vmem>>, vector<1x32x384xbf16>
    %14 = vector.shape_cast %13 : vector<1x32x384xbf16> to vector<32x384xbf16>
    "tpu.trace_start"() <{level = 10 : i32, message = "ble,ef->blf"}> : () -> ()
    %cst_10 = arith.constant dense<0.000000e+00> : vector<2x8x384xf32>
    %15 = tpu.matmul %12, %14, %cst_10 {dimension_numbers = #tpu.dot_dimension_numbers<[2], [0], [0, 1], [1], [0, 0, 0, 1, 1, 1], [], []>} : vector<2x8x32xbf16>, vector<32x384xbf16>, vector<2x8x384xf32> -> vector<2x8x384xf32>
    "tpu.trace_stop"() : () -> ()
    %16 = arith.addf %10, %15 : vector<2x8x384xf32>
    %c5_i32 = arith.constant 5 : i32
    %17 = tpu.dynamic_rotate %1 by %c5_i32 dim 1 : vector<2x8x32xf32>, i32 -> vector<2x8x32xf32>
    %18 = arith.truncf %17 : vector<2x8x32xf32> to vector<2x8x32xbf16>
    %c3 = arith.constant 3 : index
    %c0_11 = arith.constant 0 : index
    %c0_12 = arith.constant 0 : index
    %19 = vector.load %arg2[%c3, %c0_11, %c0_12] : memref<5x32x384xbf16, #tpu.memory_space<vmem>>, vector<1x32x384xbf16>
    %20 = vector.shape_cast %19 : vector<1x32x384xbf16> to vector<32x384xbf16>
    "tpu.trace_start"() <{level = 10 : i32, message = "ble,ef->blf"}> : () -> ()
    %cst_13 = arith.constant dense<0.000000e+00> : vector<2x8x384xf32>
    %21 = tpu.matmul %18, %20, %cst_13 {dimension_numbers = #tpu.dot_dimension_numbers<[2], [0], [0, 1], [1], [0, 0, 0, 1, 1, 1], [], []>} : vector<2x8x32xbf16>, vector<32x384xbf16>, vector<2x8x384xf32> -> vector<2x8x384xf32>
    "tpu.trace_stop"() : () -> ()
    %22 = arith.addf %16, %21 : vector<2x8x384xf32>
    %c4_i32 = arith.constant 4 : i32
    %23 = tpu.dynamic_rotate %1 by %c4_i32 dim 1 : vector<2x8x32xf32>, i32 -> vector<2x8x32xf32>
    %24 = arith.truncf %23 : vector<2x8x32xf32> to vector<2x8x32xbf16>
    %c4 = arith.constant 4 : index
    %c0_14 = arith.constant 0 : index
    %c0_15 = arith.constant 0 : index
    %25 = vector.load %arg2[%c4, %c0_14, %c0_15] : memref<5x32x384xbf16, #tpu.memory_space<vmem>>, vector<1x32x384xbf16>
    %26 = vector.shape_cast %25 : vector<1x32x384xbf16> to vector<32x384xbf16>
    "tpu.trace_start"() <{level = 10 : i32, message = "ble,ef->blf"}> : () -> ()
    %cst_16 = arith.constant dense<0.000000e+00> : vector<2x8x384xf32>
    %27 = tpu.matmul %24, %26, %cst_16 {dimension_numbers = #tpu.dot_dimension_numbers<[2], [0], [0, 1], [1], [0, 0, 0, 1, 1, 1], [], []>} : vector<2x8x32xbf16>, vector<32x384xbf16>, vector<2x8x384xf32> -> vector<2x8x384xf32>
    "tpu.trace_stop"() : () -> ()
    %28 = arith.addf %22, %27 : vector<2x8x384xf32>
    %29 = tpu.iota {dimensions = array<i32: 0>} : vector<8x384xi32>
    %30 = tpu.iota {dimensions = array<i32: 1>} : vector<8x384xi32>
    %c6_i32_17 = arith.constant 6 : i32
    %31 = vector.broadcast %c6_i32_17 : i32 to vector<8x384xi32>
    %c128_i32 = arith.constant 128 : i32
    %32 = vector.broadcast %c128_i32 : i32 to vector<8x384xi32>
    %33 = arith.cmpi sge, %30, %32 : vector<8x384xi32>
    %c5_i32_18 = arith.constant 5 : i32
    %34 = vector.broadcast %c5_i32_18 : i32 to vector<8x384xi32>
    %35 = arith.select %33, %34, %31 : vector<8x384xi1>, vector<8x384xi32>
    %c256_i32 = arith.constant 256 : i32
    %36 = vector.broadcast %c256_i32 : i32 to vector<8x384xi32>
    %37 = arith.cmpi sge, %30, %36 : vector<8x384xi32>
    %c4_i32_19 = arith.constant 4 : i32
    %38 = vector.broadcast %c4_i32_19 : i32 to vector<8x384xi32>
    %39 = arith.select %37, %38, %35 : vector<8x384xi1>, vector<8x384xi32>
    %40 = arith.cmpi slt, %29, %39 : vector<8x384xi32>
    %41 = vector.shape_cast %40 : vector<8x384xi1> to vector<1x8x384xi1>
    %cst_20 = arith.constant -1.000000e+30 : f32
    %42 = vector.shape_cast %41 : vector<1x8x384xi1> to vector<1x8x384xi1>
    %43 = vector.broadcast %42 : vector<1x8x384xi1> to vector<2x8x384xi1>
    %44 = vector.broadcast %cst_20 : f32 to vector<2x8x384xf32>
    %45 = arith.select %43, %28, %44 : vector<2x8x384xi1>, vector<2x8x384xf32>
    %cst_21 = arith.constant dense<0xFF800000> : vector<2x384xf32>
    %46 = vector.multi_reduction <maximumf>, %45, %cst_21 [1] : vector<2x8x384xf32> to vector<2x384xf32>
    %c0_22 = arith.constant 0 : index
    %c0_23 = arith.constant 0 : index
    %47 = vector.load %arg3[%c0_22, %c0_23] : memref<1x384xf32, #tpu.memory_space<vmem>>, vector<1x384xf32>
    %48 = vector.broadcast %47 : vector<1x384xf32> to vector<2x384xf32>
    %49 = arith.addf %46, %48 : vector<2x384xf32>
    %cst_24 = arith.constant 0.000000e+00 : f32
    %50 = vector.broadcast %cst_24 : f32 to vector<2x384xf32>
    %51 = arith.maximumf %49, %50 : vector<2x384xf32>
    %c0_25 = arith.constant 0 : index
    %c0_26 = arith.constant 0 : index
    %52 = vector.load %arg4[%c0_25, %c0_26] : memref<384x128xf32, #tpu.memory_space<vmem>>, vector<384x128xf32>
    %cst_27 = arith.constant dense<0.000000e+00> : vector<2x128xf32>
    %53 = tpu.matmul %51, %52, %cst_27 {dimension_numbers = #tpu.dot_dimension_numbers<[1], [0], [0], [1], [0, 0, 1, 1], [], []>} : vector<2x384xf32>, vector<384x128xf32>, vector<2x128xf32> -> vector<2x128xf32>
    %c0_28 = arith.constant 0 : index
    %c0_29 = arith.constant 0 : index
    %54 = vector.load %arg5[%c0_28, %c0_29] : memref<1x128xf32, #tpu.memory_space<vmem>>, vector<1x128xf32>
    %55 = vector.broadcast %54 : vector<1x128xf32> to vector<2x128xf32>
    %56 = arith.addf %53, %55 : vector<2x128xf32>
    %57 = arith.negf %56 : vector<2x128xf32>
    %58 = math.exp %57 : vector<2x128xf32>
    %cst_30 = arith.constant 1.000000e+00 : f32
    %59 = vector.broadcast %cst_30 : f32 to vector<2x128xf32>
    %60 = arith.addf %59, %58 : vector<2x128xf32>
    %61 = arith.divf %59, %60 : vector<2x128xf32>
    %c0_31 = arith.constant 0 : index
    %c0_32 = arith.constant 0 : index
    %62 = vector.load %arg6[%c0_31, %c0_32] : memref<2x128xf32, #tpu.memory_space<vmem>>, vector<2x128xf32>
    tpu.vector_store %arg6[%c0_31, %c0_32], %61 {strides = array<i32>} : memref<2x128xf32, #tpu.memory_space<vmem>>, vector<2x128xf32>,
    return
  }
  func.func @transform_0(%arg0: i32) -> (i32, i32, i32) {
    %c0_i32 = arith.constant 0 : i32
    %c0_i32_0 = arith.constant 0 : i32
    %c0_i32_1 = arith.constant 0 : i32
    return %arg0, %c0_i32, %c0_i32_0 : i32, i32, i32
  }
  func.func @transform_1(%arg0: i32) -> (i32, i32, i32) {
    %c0_i32 = arith.constant 0 : i32
    %c0_i32_0 = arith.constant 0 : i32
    %c0_i32_1 = arith.constant 0 : i32
    %c0_i32_2 = arith.constant 0 : i32
    return %c0_i32, %c0_i32_0, %c0_i32_1 : i32, i32, i32
  }
  func.func @transform_2(%arg0: i32) -> (i32, i32) {
    %c0_i32 = arith.constant 0 : i32
    %c0_i32_0 = arith.constant 0 : i32
    %c0_i32_1 = arith.constant 0 : i32
    return %c0_i32, %c0_i32_0 : i32, i32
  }
  func.func @transform_3(%arg0: i32) -> (i32, i32) {
    %c0_i32 = arith.constant 0 : i32
    %c0_i32_0 = arith.constant 0 : i32
    %c0_i32_1 = arith.constant 0 : i32
    return %c0_i32, %c0_i32_0 : i32, i32
  }
  func.func @transform_4(%arg0: i32) -> (i32, i32) {
    %c0_i32 = arith.constant 0 : i32
    %c0_i32_0 = arith.constant 0 : i32
    %c0_i32_1 = arith.constant 0 : i32
    return %c0_i32, %c0_i32_0 : i32, i32
  }
  func.func @transform_5(%arg0: i32) -> (i32, i32) {
    %c0_i32 = arith.constant 0 : i32
    %c0_i32_0 = arith.constant 0 : i32
    return %arg0, %c0_i32 : i32, i32
  }
}

</mosaic_0001>

<llo_original>
// kernel: tpu_custom_call.1
$region0: #{tpu_custom_call.1}
  #allocation0 [shape = 'u32[]', space=smem, size = 0x4, offset = 0x4, fixed_abs, tag = 'smem constant byte address 0x4 - core index']
  #allocation1 [shape = 'u32[144,128]{1,0:T(1,128)}', space=vmem, size = 0x12000, scoped, tag = 'internal scratch']
  %s0 = inlined_call_operand.hbm [shape: bf16[2,8,32], index: 0, kind: input, shape index: {}]
  %s1 = inlined_call_operand.hbm [shape: bf16[5,32,384], index: 1, kind: input, shape index: {}]
  %s2 = inlined_call_operand.vmem [shape: f32[1,384], index: 2, kind: input, shape index: {}]
  %s3 = inlined_call_operand.hbm [shape: f32[384,128], index: 3, kind: input, shape index: {}]
  %s4 = inlined_call_operand.vmem [shape: f32[1,128], index: 4, kind: input, shape index: {}]
  %s5 = inlined_call_operand.hbm [shape: f32[2,128], index: 5, kind: output, shape index: {}]
  %s6 = sld [smem:[#allocation0]]
  $region42: #{tpu_custom_call.1} parent=0
    _
  %s8 = ssub.s32 1, %s6
  %s9 = scalar_select 0, %s8, %s6
  $region1: #{tpu_custom_call.1} parent=0
    #allocation2 [shape = 'u8[4096]{0}', space=vmem, size = 0x1000, scoped, tag = 'input window, operand 0, single buffered']
    #allocation3 [shape = 's32[1]{0}', space=sflag, size = 0x4, scoped, tag = 'scoped memory for tpu_custom_call.1']
    #allocation4 [shape = 's32[1]{0}', space=sflag, size = 0x4, scoped, tag = 'scoped memory for tpu_custom_call.1']
    #allocation5 [shape = 'u8[122880]{0}', space=vmem, size = 0x1e000, scoped, tag = 'input window, operand 1, single buffered']
    #allocation6 [shape = 's32[1]{0}', space=sflag, size = 0x4, scoped, tag = 'scoped memory for tpu_custom_call.1']
    #allocation7 [shape = 'u8[196608]{0}', space=vmem, size = 0x30000, scoped, tag = 'input window, operand 3, single buffered']
    #allocation8 [shape = 'u8[1024]{0}', space=vmem, size = 0x400, scoped, tag = 'output window, operand 0, single buffered']
    %10 = vsyncpa [#allocation3], 0
    %11 = vsyncpa [#allocation6], 0
    %12 = vsyncpa [#allocation4], 0
    // Predicated region
    $region2: #{tpu_custom_call.1} parent=1 // pred_check
      _
    $region3: #{tpu_custom_call.1} parent=1 // pred_check_branch
      %14 = sbr.rel (0) target = $region5
    $region4: #{tpu_custom_call.1} parent=1 // pred_region
      %s16 = ssub.s32 128, 128
      %17 = vsyncadd [#allocation3], %s16
      %s18 = sshll.u32 [#allocation2], 4
      %s19 = int_to_ptr.vmem [resolvable:$true] %s18
      %24 = dma.hbm_to_vmem [thread:$0]  %s0, 128, %s19, [#allocation3], 64, 64, 4
    $region5: #{tpu_custom_call.1} parent=1 // pred_fallthru
      _
    // Predicated region
    $region6: #{tpu_custom_call.1} parent=1 // pred_check
      _
    $region7: #{tpu_custom_call.1} parent=1 // pred_check_branch
      %26 = sbr.rel (0) target = $region9
    $region8: #{tpu_custom_call.1} parent=1 // pred_region
      %s28 = ssub.s32 3840, 3840
      %29 = vsyncadd [#allocation6], %s28
      %s30 = sshll.u32 [#allocation5], 4
      %s31 = int_to_ptr.vmem [resolvable:$true] %s30
      %36 = dma.hbm_to_vmem [thread:$0]  %s1, 3840, %s31, [#allocation6], 192, 192, 12
    $region9: #{tpu_custom_call.1} parent=1 // pred_fallthru
      _
    // Predicated region
    $region10: #{tpu_custom_call.1} parent=1 // pred_check
      _
    $region11: #{tpu_custom_call.1} parent=1 // pred_check_branch
      %38 = sbr.rel (0) target = $region13
    $region12: #{tpu_custom_call.1} parent=1 // pred_region
      _
    $region13: #{tpu_custom_call.1} parent=1 // pred_fallthru
      _
    // Predicated region
    $region14: #{tpu_custom_call.1} parent=1 // pred_check
      _
    $region15: #{tpu_custom_call.1} parent=1 // pred_check_branch
      %40 = sbr.rel (0) target = $region17
    $region16: #{tpu_custom_call.1} parent=1 // pred_region
      %s42 = ssub.s32 6144, 6144
      %43 = vsyncadd [#allocation6], %s42
      %s44 = sshll.u32 [#allocation7], 4
      %s45 = int_to_ptr.vmem [resolvable:$true] %s44
      %50 = dma.hbm_to_vmem [thread:$0]  %s3, 6144, %s45, [#allocation6], 128, 128, 8
    $region17: #{tpu_custom_call.1} parent=1 // pred_fallthru
      _
    // Predicated region
    $region18: #{tpu_custom_call.1} parent=1 // pred_check
      _
    $region19: #{tpu_custom_call.1} parent=1 // pred_check_branch
      %52 = sbr.rel (0) target = $region21
    $region20: #{tpu_custom_call.1} parent=1 // pred_region
      _
    $region21: #{tpu_custom_call.1} parent=1 // pred_fallthru
      _
    // Predicated region
    $region22: #{tpu_custom_call.1} parent=1 // pred_check
      _
    $region23: #{tpu_custom_call.1} parent=1 // pred_check_branch
      %54 = sbr.rel (0) target = $region25
    $region24: #{tpu_custom_call.1} parent=1 // pred_region
      %55 = dma.done [#allocation3], 128
    $region25: #{tpu_custom_call.1} parent=1 // pred_fallthru
      _
    // Predicated region
    $region26: #{tpu_custom_call.1} parent=1 // pred_check
      _
    $region27: #{tpu_custom_call.1} parent=1 // pred_check_branch
      %57 = sbr.rel (0) target = $region29
    $region28: #{tpu_custom_call.1} parent=1 // pred_region
      %58 = dma.done [#allocation6], 3840
    $region29: #{tpu_custom_call.1} parent=1 // pred_fallthru
      _
    // Predicated region
    $region30: #{tpu_custom_call.1} parent=1 // pred_check
      _
    $region31: #{tpu_custom_call.1} parent=1 // pred_check_branch
      %60 = sbr.rel (0) target = $region33
    $region32: #{tpu_custom_call.1} parent=1 // pred_region
      %61 = dma.done [#allocation6], 6144
    $region33: #{tpu_custom_call.1} parent=1 // pred_fallthru
      _
    %v63 = vld [vmem:[#allocation2] sm:$0xf]
    %v64 = vld [vmem:[#allocation2 + $0x4] sm:$0xf]
    %v65 = vunpack.c.l.bf16 %v63
    %v66 = vunpack.c.l.bf16 %v64
    %v67 = vld [vmem:[#allocation5] sm:$0xff]
    %v68 = vld [vmem:[#allocation5 + $0x8] sm:$0xf]
    %v69 = vld [vmem:[#allocation5 + $0xc] sm:$0xff]
    %v70 = vld [vmem:[#allocation5 + $0x14] sm:$0xf]
    %v71 = vld [vmem:[#allocation5 + $0x18] sm:$0xff]
    %v72 = vld [vmem:[#allocation5 + $0x20] sm:$0xf]
    %v73 = vld [vmem:[#allocation5 + $0x24] sm:$0xff]
    %v74 = vld [vmem:[#allocation5 + $0x2c] sm:$0xf]
    %v75 = vrot.slane %v65, 1
    %v76 = vrot.slane %v66, 1
    %v77 = vpack.c.bf16 %v75, %v75
    %v78 = vpack.c.bf16 %v76, %v76
    %s79 = scalar_lea.vmem [#allocation5], 48
    %v80 = vld [vmem:[%s79] sm:$0xff]
    %v81 = vld [vmem:[%s79 + $0x8] sm:$0xf]
    %v82 = vld [vmem:[%s79 + $0xc] sm:$0xff]
    %v83 = vld [vmem:[%s79 + $0x14] sm:$0xf]
    %v84 = vld [vmem:[%s79 + $0x18] sm:$0xff]
    %v85 = vld [vmem:[%s79 + $0x20] sm:$0xf]
    %v86 = vld [vmem:[%s79 + $0x24] sm:$0xff]
    %v87 = vld [vmem:[%s79 + $0x2c] sm:$0xf]
    %v90 = vunpack.c.l.b16 %v77
    %v91 = vunpack.c.l.b16 %v78
    %v92 = vpack.c.b16 %v91, %v90
    %v101 = vunpack.c.l.b16 %v80
    %v102 = vunpack.c.h.b16 %v80
    %v103 = vunpack.c.l.b16 %v81
    %v104 = vunpack.c.l.b16 %v82
    %v105 = vunpack.c.h.b16 %v82
    %v106 = vunpack.c.l.b16 %v83
    %v107 = vunpack.c.l.b16 %v84
    %v108 = vunpack.c.h.b16 %v84
    %v109 = vunpack.c.l.b16 %v85
    %v110 = vunpack.c.l.b16 %v86
    %v111 = vunpack.c.h.b16 %v86
    %v112 = vunpack.c.l.b16 %v87
    %v113 = vpack.c.b16 %v104, %v101
    %v114 = vpack.c.b16 %v105, %v102
    %v115 = vpack.c.b16 %v106, %v103
    %v116 = vpack.c.b16 %v110, %v107
    %v117 = vpack.c.b16 %v111, %v108
    %v118 = vpack.c.b16 %v112, %v109
    %vm125 = vcmask 261120
    %v127 = vsel %vm125, %v92, 0
    %129 = vmatprep.subr.bf16.mxu0 %v114
    %130 = vmatpush1.bf16.msra.mxu0 %v113
    %131 = vmatprep.subr.bf16.mxu0 %v117
    %132 = vmatpush1.bf16.msra.mxu0 %v116
    %133 = vmatprep.subr.bf16.mxu0 0
    %134 = vmatpush1.bf16.msra.mxu0 0
    %135 = vmatprep.subr.bf16.mxu0 0
    %136 = vmatpush1.bf16.msra.mxu0 0
    %137 = vmatprep.subr.bf16.mxu0 0
    %138 = vmatpush1.bf16.msra.mxu0 0
    %139 = vmatprep.subr.bf16.mxu0 0
    %140 = vmatpush1.bf16.msra.mxu0 0
    %141 = vmatprep.subr.bf16.mxu0 0
    %142 = vmatpush1.bf16.msra.mxu0 0
    %143 = vmatprep.subr.bf16.mxu0 0
    %144 = vmatpush1.bf16.msra.mxu0 0
    %145 = vmatprep.subr.bf16.mxu0 0
    %146 = vmatpush1.bf16.msra.mxu0 0
    %147 = vmatprep.subr.bf16.mxu0 0
    %148 = vmatpush1.bf16.msra.mxu0 0
    %149 = vmatprep.subr.bf16.mxu0 0
    %150 = vmatpush1.bf16.msra.mxu0 0
    %151 = vmatprep.subr.bf16.mxu0 0
    %152 = vmatpush1.bf16.msra.mxu0 0
    %153 = vmatprep.subr.bf16.mxu0 0
    %154 = vmatpush1.bf16.msra.mxu0 0
    %155 = vmatprep.subr.bf16.mxu0 0
    %156 = vmatpush1.bf16.msra.mxu0 0
    %157 = vmatprep.subr.bf16.mxu0 0
    %158 = vmatpush1.bf16.msra.mxu0 0
    %159 = vmatprep.subr.bf16.mxu0 0
    %160 = vmatpush1.bf16.msra.mxu0 0
    %161 = vmatprep.mubr.bf16.mxu0 0
    %162 = vmatmul.mubr.bf16.gmra.mrb[0].mxu0 %v127
    %v163 = vpop.f32.mrb[0].mxu0
    %v164 = vadd.f32 0.0, %v163
    %v165 = vpop.f32.mrb[0].mxu0
    %v166 = vadd.f32 0.0, %v165
    %v167 = vpop.f32.mrb[0].mxu0
    %v168 = vadd.f32 0.0, %v167
    %v169 = vpop.f32.mrb[0].mxu0
    %v170 = vadd.f32 0.0, %v169
    %171 = vdwg.mxu0
    %172 = vmatprep.subr.bf16.mxu0 0
    %173 = vmatpush1.bf16.msra.mxu0 %v115
    %174 = vmatprep.subr.bf16.mxu0 0
    %175 = vmatpush1.bf16.msra.mxu0 %v118
    %176 = vmatprep.subr.bf16.mxu0 0
    %177 = vmatpush1.bf16.msra.mxu0 0
    %178 = vmatprep.subr.bf16.mxu0 0
    %179 = vmatpush1.bf16.msra.mxu0 0
    %180 = vmatprep.subr.bf16.mxu0 0
    %181 = vmatpush1.bf16.msra.mxu0 0
    %182 = vmatprep.subr.bf16.mxu0 0
    %183 = vmatpush1.bf16.msra.mxu0 0
    %184 = vmatprep.subr.bf16.mxu0 0
    %185 = vmatpush1.bf16.msra.mxu0 0
    %186 = vmatprep.subr.bf16.mxu0 0
    %187 = vmatpush1.bf16.msra.mxu0 0
    %188 = vmatprep.subr.bf16.mxu0 0
    %189 = vmatpush1.bf16.msra.mxu0 0
    %190 = vmatprep.subr.bf16.mxu0 0
    %191 = vmatpush1.bf16.msra.mxu0 0
    %192 = vmatprep.subr.bf16.mxu0 0
    %193 = vmatpush1.bf16.msra.mxu0 0
    %194 = vmatprep.subr.bf16.mxu0 0
    %195 = vmatpush1.bf16.msra.mxu0 0
    %196 = vmatprep.subr.bf16.mxu0 0
    %197 = vmatpush1.bf16.msra.mxu0 0
    %198 = vmatprep.subr.bf16.mxu0 0
    %199 = vmatpush1.bf16.msra.mxu0 0
    %200 = vmatprep.subr.bf16.mxu0 0
    %201 = vmatpush1.bf16.msra.mxu0 0
    %202 = vmatprep.subr.bf16.mxu0 0
    %203 = vmatpush1.bf16.msra.mxu0 0
    %204 = vmatprep.mubr.bf16.mxu0 0
    %205 = vmatmul.mubr.bf16.gmra.mrb[0].mxu0 %v127
    %v206 = vpop.f32.mrb[0].mxu0
    %v207 = vadd.f32 0.0, %v206
    %v208 = vpop.f32.mrb[0].mxu0
    %v209 = vpop.f32.mrb[0].mxu0
    %v210 = vadd.f32 0.0, %v209
    %v211 = vpop.f32.mrb[0].mxu0
    %212 = vdwg.mxu0
    %v215 = vunpack.c.l.b16 %v63
    %v216 = vunpack.c.l.b16 %v64
    %v217 = vpack.c.b16 %v216, %v215
    %v226 = vunpack.c.l.b16 %v67
    %v227 = vunpack.c.h.b16 %v67
    %v228 = vunpack.c.l.b16 %v68
    %v229 = vunpack.c.l.b16 %v69
    %v230 = vunpack.c.h.b16 %v69
    %v231 = vunpack.c.l.b16 %v70
    %v232 = vunpack.c.l.b16 %v71
    %v233 = vunpack.c.h.b16 %v71
    %v234 = vunpack.c.l.b16 %v72
    %v235 = vunpack.c.l.b16 %v73
    %v236 = vunpack.c.h.b16 %v73
    %v237 = vunpack.c.l.b16 %v74
    %v238 = vpack.c.b16 %v229, %v226
    %v239 = vpack.c.b16 %v230, %v227
    %v240 = vpack.c.b16 %v231, %v228
    %v241 = vpack.c.b16 %v235, %v232
    %v242 = vpack.c.b16 %v236, %v233
    %v243 = vpack.c.b16 %v237, %v234
    %v251 = vsel %vm125, %v217, 0
    %253 = vmatprep.subr.bf16.mxu0 %v239
    %254 = vmatpush1.bf16.msra.mxu0 %v238
    %255 = vmatprep.subr.bf16.mxu0 %v242
    %256 = vmatpush1.bf16.msra.mxu0 %v241
    %257 = vmatprep.subr.bf16.mxu0 0
    %258 = vmatpush1.bf16.msra.mxu0 0
    %259 = vmatprep.subr.bf16.mxu0 0
    %260 = vmatpush1.bf16.msra.mxu0 0
    %261 = vmatprep.subr.bf16.mxu0 0
    %262 = vmatpush1.bf16.msra.mxu0 0
    %263 = vmatprep.subr.bf16.mxu0 0
    %264 = vmatpush1.bf16.msra.mxu0 0
    %265 = vmatprep.subr.bf16.mxu0 0
    %266 = vmatpush1.bf16.msra.mxu0 0
    %267 = vmatprep.subr.bf16.mxu0 0
    %268 = vmatpush1.bf16.msra.mxu0 0
    %269 = vmatprep.subr.bf16.mxu0 0
    %270 = vmatpush1.bf16.msra.mxu0 0
    %271 = vmatprep.subr.bf16.mxu0 0
    %272 = vmatpush1.bf16.msra.mxu0 0
    %273 = vmatprep.subr.bf16.mxu0 0
    %274 = vmatpush1.bf16.msra.mxu0 0
    %275 = vmatprep.subr.bf16.mxu0 0
    %276 = vmatpush1.bf16.msra.mxu0 0
    %277 = vmatprep.subr.bf16.mxu0 0
    %278 = vmatpush1.bf16.msra.mxu0 0
    %279 = vmatprep.subr.bf16.mxu0 0
    %280 = vmatpush1.bf16.msra.mxu0 0
    %281 = vmatprep.subr.bf16.mxu0 0
    %282 = vmatpush1.bf16.msra.mxu0 0
    %283 = vmatprep.subr.bf16.mxu0 0
    %284 = vmatpush1.bf16.msra.mxu0 0
    %285 = vmatprep.mubr.bf16.mxu0 0
    %286 = vmatmul.mubr.bf16.gmra.mrb[0].mxu0 %v251
    %v287 = vpop.f32.mrb[0].mxu0
    %v288 = vadd.f32 %v164, %v287
    %v289 = vpop.f32.mrb[0].mxu0
    %v290 = vadd.f32 %v166, %v289
    %v291 = vpop.f32.mrb[0].mxu0
    %v292 = vadd.f32 %v168, %v291
    %v293 = vpop.f32.mrb[0].mxu0
    %v294 = vadd.f32 %v170, %v293
    %295 = vdwg.mxu0
    %296 = vmatprep.subr.bf16.mxu0 0
    %297 = vmatpush1.bf16.msra.mxu0 %v240
    %298 = vmatprep.subr.bf16.mxu0 0
    %299 = vmatpush1.bf16.msra.mxu0 %v243
    %300 = vmatprep.subr.bf16.mxu0 0
    %301 = vmatpush1.bf16.msra.mxu0 0
    %302 = vmatprep.subr.bf16.mxu0 0
    %303 = vmatpush1.bf16.msra.mxu0 0
    %304 = vmatprep.subr.bf16.mxu0 0
    %305 = vmatpush1.bf16.msra.mxu0 0
    %306 = vmatprep.subr.bf16.mxu0 0
    %307 = vmatpush1.bf16.msra.mxu0 0
    %308 = vmatprep.subr.bf16.mxu0 0
    %309 = vmatpush1.bf16.msra.mxu0 0
    %310 = vmatprep.subr.bf16.mxu0 0
    %311 = vmatpush1.bf16.msra.mxu0 0
    %312 = vmatprep.subr.bf16.mxu0 0
    %313 = vmatpush1.bf16.msra.mxu0 0
    %314 = vmatprep.subr.bf16.mxu0 0
    %315 = vmatpush1.bf16.msra.mxu0 0
    %316 = vmatprep.subr.bf16.mxu0 0
    %317 = vmatpush1.bf16.msra.mxu0 0
    %318 = vmatprep.subr.bf16.mxu0 0
    %319 = vmatpush1.bf16.msra.mxu0 0
    %320 = vmatprep.subr.bf16.mxu0 0
    %321 = vmatpush1.bf16.msra.mxu0 0
    %322 = vmatprep.subr.bf16.mxu0 0
    %323 = vmatpush1.bf16.msra.mxu0 0
    %324 = vmatprep.subr.bf16.mxu0 0
    %325 = vmatpush1.bf16.msra.mxu0 0
    %326 = vmatprep.subr.bf16.mxu0 0
    %327 = vmatpush1.bf16.msra.mxu0 0
    %328 = vmatprep.mubr.bf16.mxu0 0
    %329 = vmatmul.mubr.bf16.gmra.mrb[0].mxu0 %v251
    %v330 = vpop.f32.mrb[0].mxu0
    %v331 = vadd.f32 %v207, %v330
    %v332 = vpop.f32.mrb[0].mxu0
    %v333 = vpop.f32.mrb[0].mxu0
    %v334 = vadd.f32 %v210, %v333
    %v335 = vpop.f32.mrb[0].mxu0
    %336 = vdwg.mxu0
    %v337 = vrot.slane %v65, 2
    %v338 = vrot.slane %v66, 2
    %v339 = vpack.c.bf16 %v337, %v337
    %v340 = vpack.c.bf16 %v338, %v338
    %s341 = scalar_lea.vmem [#allocation5], 96
    %v342 = vld [vmem:[%s341] sm:$0xff]
    %v343 = vld [vmem:[%s341 + $0x8] sm:$0xf]
    %v344 = vld [vmem:[%s341 + $0xc] sm:$0xff]
    %v345 = vld [vmem:[%s341 + $0x14] sm:$0xf]
    %v346 = vld [vmem:[%s341 + $0x18] sm:$0xff]
    %v347 = vld [vmem:[%s341 + $0x20] sm:$0xf]
    %v348 = vld [vmem:[%s341 + $0x24] sm:$0xff]
    %v349 = vld [vmem:[%s341 + $0x2c] sm:$0xf]
    %v352 = vunpack.c.l.b16 %v339
    %v353 = vunpack.c.l.b16 %v340
    %v354 = vpack.c.b16 %v353, %v352
    %v363 = vunpack.c.l.b16 %v342
    %v364 = vunpack.c.h.b16 %v342
    %v365 = vunpack.c.l.b16 %v343
    %v366 = vunpack.c.l.b16 %v344
    %v367 = vunpack.c.h.b16 %v344
    %v368 = vunpack.c.l.b16 %v345
    %v369 = vunpack.c.l.b16 %v346
    %v370 = vunpack.c.h.b16 %v346
    %v371 = vunpack.c.l.b16 %v347
    %v372 = vunpack.c.l.b16 %v348
    %v373 = vunpack.c.h.b16 %v348
    %v374 = vunpack.c.l.b16 %v349
    %v375 = vpack.c.b16 %v366, %v363
    %v376 = vpack.c.b16 %v367, %v364
    %v377 = vpack.c.b16 %v368, %v365
    %v378 = vpack.c.b16 %v372, %v369
    %v379 = vpack.c.b16 %v373, %v370
    %v380 = vpack.c.b16 %v374, %v371
    %v388 = vsel %vm125, %v354, 0
    %390 = vmatprep.subr.bf16.mxu0 %v376
    %391 = vmatpush1.bf16.msra.mxu0 %v375
    %392 = vmatprep.subr.bf16.mxu0 %v379
    %393 = vmatpush1.bf16.msra.mxu0 %v378
    %394 = vmatprep.subr.bf16.mxu0 0
    %395 = vmatpush1.bf16.msra.mxu0 0
    %396 = vmatprep.subr.bf16.mxu0 0
    %397 = vmatpush1.bf16.msra.mxu0 0
    %398 = vmatprep.subr.bf16.mxu0 0
    %399 = vmatpush1.bf16.msra.mxu0 0
    %400 = vmatprep.subr.bf16.mxu0 0
    %401 = vmatpush1.bf16.msra.mxu0 0
    %402 = vmatprep.subr.bf16.mxu0 0
    %403 = vmatpush1.bf16.msra.mxu0 0
    %404 = vmatprep.subr.bf16.mxu0 0
    %405 = vmatpush1.bf16.msra.mxu0 0
    %406 = vmatprep.subr.bf16.mxu0 0
    %407 = vmatpush1.bf16.msra.mxu0 0
    %408 = vmatprep.subr.bf16.mxu0 0
    %409 = vmatpush1.bf16.msra.mxu0 0
    %410 = vmatprep.subr.bf16.mxu0 0
    %411 = vmatpush1.bf16.msra.mxu0 0
    %412 = vmatprep.subr.bf16.mxu0 0
    %413 = vmatpush1.bf16.msra.mxu0 0
    %414 = vmatprep.subr.bf16.mxu0 0
    %415 = vmatpush1.bf16.msra.mxu0 0
    %416 = vmatprep.subr.bf16.mxu0 0
    %417 = vmatpush1.bf16.msra.mxu0 0
    %418 = vmatprep.subr.bf16.mxu0 0
    %419 = vmatpush1.bf16.msra.mxu0 0
    %420 = vmatprep.subr.bf16.mxu0 0
    %421 = vmatpush1.bf16.msra.mxu0 0
    %422 = vmatprep.mubr.bf16.mxu0 0
    %423 = vmatmul.mubr.bf16.gmra.mrb[0].mxu0 %v388
    %v424 = vpop.f32.mrb[0].mxu0
    %v425 = vadd.f32 0.0, %v424
    %v426 = vpop.f32.mrb[0].mxu0
    %v427 = vadd.f32 0.0, %v426
    %v428 = vpop.f32.mrb[0].mxu0
    %v429 = vadd.f32 0.0, %v428
    %v430 = vpop.f32.mrb[0].mxu0
    %v431 = vadd.f32 0.0, %v430
    %432 = vdwg.mxu0
    %433 = vmatprep.subr.bf16.mxu0 0
    %434 = vmatpush1.bf16.msra.mxu0 %v377
    %435 = vmatprep.subr.bf16.mxu0 0
    %436 = vmatpush1.bf16.msra.mxu0 %v380
    %437 = vmatprep.subr.bf16.mxu0 0
    %438 = vmatpush1.bf16.msra.mxu0 0
    %439 = vmatprep.subr.bf16.mxu0 0
    %440 = vmatpush1.bf16.msra.mxu0 0
    %441 = vmatprep.subr.bf16.mxu0 0
    %442 = vmatpush1.bf16.msra.mxu0 0
    %443 = vmatprep.subr.bf16.mxu0 0
    %444 = vmatpush1.bf16.msra.mxu0 0
    %445 = vmatprep.subr.bf16.mxu0 0
    %446 = vmatpush1.bf16.msra.mxu0 0
    %447 = vmatprep.subr.bf16.mxu0 0
    %448 = vmatpush1.bf16.msra.mxu0 0
    %449 = vmatprep.subr.bf16.mxu0 0
    %450 = vmatpush1.bf16.msra.mxu0 0
    %451 = vmatprep.subr.bf16.mxu0 0
    %452 = vmatpush1.bf16.msra.mxu0 0
    %453 = vmatprep.subr.bf16.mxu0 0
    %454 = vmatpush1.bf16.msra.mxu0 0
    %455 = vmatprep.subr.bf16.mxu0 0
    %456 = vmatpush1.bf16.msra.mxu0 0
    %457 = vmatprep.subr.bf16.mxu0 0
    %458 = vmatpush1.bf16.msra.mxu0 0
    %459 = vmatprep.subr.bf16.mxu0 0
    %460 = vmatpush1.bf16.msra.mxu0 0
    %461 = vmatprep.subr.bf16.mxu0 0
    %462 = vmatpush1.bf16.msra.mxu0 0
    %463 = vmatprep.subr.bf16.mxu0 0
    %464 = vmatpush1.bf16.msra.mxu0 0
    %465 = vmatprep.mubr.bf16.mxu0 0
    %466 = vmatmul.mubr.bf16.gmra.mrb[0].mxu0 %v388
    %v467 = vpop.f32.mrb[0].mxu0
    %v468 = vadd.f32 0.0, %v467
    %v469 = vpop.f32.mrb[0].mxu0
    %v470 = vpop.f32.mrb[0].mxu0
    %v471 = vadd.f32 0.0, %v470
    %v472 = vpop.f32.mrb[0].mxu0
    %473 = vdwg.mxu0
    %v474 = vadd.f32 %v288, %v425
    %v475 = vadd.f32 %v290, %v427
    %v476 = vadd.f32 %v331, %v468
    %v477 = vadd.f32 %v292, %v429
    %v478 = vadd.f32 %v294, %v431
    %v479 = vadd.f32 %v334, %v471
    %v480 = vrot.slane %v65, 3
    %v481 = vrot.slane %v66, 3
    %v482 = vpack.c.bf16 %v480, %v480
    %v483 = vpack.c.bf16 %v481, %v481
    %s484 = scalar_lea.vmem [#allocation5], 144
    %v485 = vld [vmem:[%s484] sm:$0xff]
    %v486 = vld [vmem:[%s484 + $0x8] sm:$0xf]
    %v487 = vld [vmem:[%s484 + $0xc] sm:$0xff]
    %v488 = vld [vmem:[%s484 + $0x14] sm:$0xf]
    %v489 = vld [vmem:[%s484 + $0x18] sm:$0xff]
    %v490 = vld [vmem:[%s484 + $0x20] sm:$0xf]
    %v491 = vld [vmem:[%s484 + $0x24] sm:$0xff]
    %v492 = vld [vmem:[%s484 + $0x2c] sm:$0xf]
    %v495 = vunpack.c.l.b16 %v482
    %v496 = vunpack.c.l.b16 %v483
    %v497 = vpack.c.b16 %v496, %v495
    %v506 = vunpack.c.l.b16 %v485
    %v507 = vunpack.c.h.b16 %v485
    %v508 = vunpack.c.l.b16 %v486
    %v509 = vunpack.c.l.b16 %v487
    %v510 = vunpack.c.h.b16 %v487
    %v511 = vunpack.c.l.b16 %v488
    %v512 = vunpack.c.l.b16 %v489
    %v513 = vunpack.c.h.b16 %v489
    %v514 = vunpack.c.l.b16 %v490
    %v515 = vunpack.c.l.b16 %v491
    %v516 = vunpack.c.h.b16 %v491
    %v517 = vunpack.c.l.b16 %v492
    %v518 = vpack.c.b16 %v509, %v506
    %v519 = vpack.c.b16 %v510, %v507
    %v520 = vpack.c.b16 %v511, %v508
    %v521 = vpack.c.b16 %v515, %v512
    %v522 = vpack.c.b16 %v516, %v513
    %v523 = vpack.c.b16 %v517, %v514
    %v531 = vsel %vm125, %v497, 0
    %533 = vmatprep.subr.bf16.mxu0 %v519
    %534 = vmatpush1.bf16.msra.mxu0 %v518
    %535 = vmatprep.subr.bf16.mxu0 %v522
    %536 = vmatpush1.bf16.msra.mxu0 %v521
    %537 = vmatprep.subr.bf16.mxu0 0
    %538 = vmatpush1.bf16.msra.mxu0 0
    %539 = vmatprep.subr.bf16.mxu0 0
    %540 = vmatpush1.bf16.msra.mxu0 0
    %541 = vmatprep.subr.bf16.mxu0 0
    %542 = vmatpush1.bf16.msra.mxu0 0
    %543 = vmatprep.subr.bf16.mxu0 0
    %544 = vmatpush1.bf16.msra.mxu0 0
    %545 = vmatprep.subr.bf16.mxu0 0
    %546 = vmatpush1.bf16.msra.mxu0 0
    %547 = vmatprep.subr.bf16.mxu0 0
    %548 = vmatpush1.bf16.msra.mxu0 0
    %549 = vmatprep.subr.bf16.mxu0 0
    %550 = vmatpush1.bf16.msra.mxu0 0
    %551 = vmatprep.subr.bf16.mxu0 0
    %552 = vmatpush1.bf16.msra.mxu0 0
    %553 = vmatprep.subr.bf16.mxu0 0
    %554 = vmatpush1.bf16.msra.mxu0 0
    %555 = vmatprep.subr.bf16.mxu0 0
    %556 = vmatpush1.bf16.msra.mxu0 0
    %557 = vmatprep.subr.bf16.mxu0 0
    %558 = vmatpush1.bf16.msra.mxu0 0
    %559 = vmatprep.subr.bf16.mxu0 0
    %560 = vmatpush1.bf16.msra.mxu0 0
    %561 = vmatprep.subr.bf16.mxu0 0
    %562 = vmatpush1.bf16.msra.mxu0 0
    %563 = vmatprep.subr.bf16.mxu0 0
    %564 = vmatpush1.bf16.msra.mxu0 0
    %565 = vmatprep.mubr.bf16.mxu0 0
    %566 = vmatmul.mubr.bf16.gmra.mrb[0].mxu0 %v531
    %v567 = vpop.f32.mrb[0].mxu0
    %v568 = vadd.f32 0.0, %v567
    %v569 = vpop.f32.mrb[0].mxu0
    %v570 = vadd.f32 0.0, %v569
    %v571 = vpop.f32.mrb[0].mxu0
    %v572 = vadd.f32 0.0, %v571
    %v573 = vpop.f32.mrb[0].mxu0
    %v574 = vadd.f32 0.0, %v573
    %575 = vdwg.mxu0
    %576 = vmatprep.subr.bf16.mxu0 0
    %577 = vmatpush1.bf16.msra.mxu0 %v520
    %578 = vmatprep.subr.bf16.mxu0 0
    %579 = vmatpush1.bf16.msra.mxu0 %v523
    %580 = vmatprep.subr.bf16.mxu0 0
    %581 = vmatpush1.bf16.msra.mxu0 0
    %582 = vmatprep.subr.bf16.mxu0 0
    %583 = vmatpush1.bf16.msra.mxu0 0
    %584 = vmatprep.subr.bf16.mxu0 0
    %585 = vmatpush1.bf16.msra.mxu0 0
    %586 = vmatprep.subr.bf16.mxu0 0
    %587 = vmatpush1.bf16.msra.mxu0 0
    %588 = vmatprep.subr.bf16.mxu0 0
    %589 = vmatpush1.bf16.msra.mxu0 0
    %590 = vmatprep.subr.bf16.mxu0 0
    %591 = vmatpush1.bf16.msra.mxu0 0
    %592 = vmatprep.subr.bf16.mxu0 0
    %593 = vmatpush1.bf16.msra.mxu0 0
    %594 = vmatprep.subr.bf16.mxu0 0
    %595 = vmatpush1.bf16.msra.mxu0 0
    %596 = vmatprep.subr.bf16.mxu0 0
    %597 = vmatpush1.bf16.msra.mxu0 0
    %598 = vmatprep.subr.bf16.mxu0 0
    %599 = vmatpush1.bf16.msra.mxu0 0
    %600 = vmatprep.subr.bf16.mxu0 0
    %601 = vmatpush1.bf16.msra.mxu0 0
    %602 = vmatprep.subr.bf16.mxu0 0
    %603 = vmatpush1.bf16.msra.mxu0 0
    %604 = vmatprep.subr.bf16.mxu0 0
    %605 = vmatpush1.bf16.msra.mxu0 0
    %606 = vmatprep.subr.bf16.mxu0 0
    %607 = vmatpush1.bf16.msra.mxu0 0
    %608 = vmatprep.mubr.bf16.mxu0 0
    %609 = vmatmul.mubr.bf16.gmra.mrb[0].mxu0 %v531
    %v610 = vpop.f32.mrb[0].mxu0
    %v611 = vadd.f32 0.0, %v610
    %v612 = vpop.f32.mrb[0].mxu0
    %v613 = vpop.f32.mrb[0].mxu0
    %v614 = vadd.f32 0.0, %v613
    %v615 = vpop.f32.mrb[0].mxu0
    %616 = vdwg.mxu0
    %v617 = vadd.f32 %v474, %v568
    %v618 = vadd.f32 %v475, %v570
    %v619 = vadd.f32 %v476, %v611
    %v620 = vadd.f32 %v477, %v572
    %v621 = vadd.f32 %v478, %v574
    %v622 = vadd.f32 %v479, %v614
    %v623 = vrot.slane %v65, 4
    %v624 = vrot.slane %v66, 4
    %v625 = vpack.c.bf16 %v623, %v623
    %v626 = vpack.c.bf16 %v624, %v624
    %s627 = scalar_lea.vmem [#allocation5], 192
    %v628 = vld [vmem:[%s627] sm:$0xff]
    %v629 = vld [vmem:[%s627 + $0x8] sm:$0xf]
    %v630 = vld [vmem:[%s627 + $0xc] sm:$0xff]
    %v631 = vld [vmem:[%s627 + $0x14] sm:$0xf]
    %v632 = vld [vmem:[%s627 + $0x18] sm:$0xff]
    %v633 = vld [vmem:[%s627 + $0x20] sm:$0xf]
    %v634 = vld [vmem:[%s627 + $0x24] sm:$0xff]
    %v635 = vld [vmem:[%s627 + $0x2c] sm:$0xf]
    %v638 = vunpack.c.l.b16 %v625
    %v639 = vunpack.c.l.b16 %v626
    %v640 = vpack.c.b16 %v639, %v638
    %v649 = vunpack.c.l.b16 %v628
    %v650 = vunpack.c.h.b16 %v628
    %v651 = vunpack.c.l.b16 %v629
    %v652 = vunpack.c.l.b16 %v630
    %v653 = vunpack.c.h.b16 %v630
    %v654 = vunpack.c.l.b16 %v631
    %v655 = vunpack.c.l.b16 %v632
    %v656 = vunpack.c.h.b16 %v632
    %v657 = vunpack.c.l.b16 %v633
    %v658 = vunpack.c.l.b16 %v634
    %v659 = vunpack.c.h.b16 %v634
    %v660 = vunpack.c.l.b16 %v635
    %v661 = vpack.c.b16 %v652, %v649
    %v662 = vpack.c.b16 %v653, %v650
    %v663 = vpack.c.b16 %v654, %v651
    %v664 = vpack.c.b16 %v658, %v655
    %v665 = vpack.c.b16 %v659, %v656
    %v666 = vpack.c.b16 %v660, %v657
    %v674 = vsel %vm125, %v640, 0
    %676 = vmatprep.subr.bf16.mxu0 %v662
    %677 = vmatpush1.bf16.msra.mxu0 %v661
    %678 = vmatprep.subr.bf16.mxu0 %v665
    %679 = vmatpush1.bf16.msra.mxu0 %v664
    %680 = vmatprep.subr.bf16.mxu0 0
    %681 = vmatpush1.bf16.msra.mxu0 0
    %682 = vmatprep.subr.bf16.mxu0 0
    %683 = vmatpush1.bf16.msra.mxu0 0
    %684 = vmatprep.subr.bf16.mxu0 0
    %685 = vmatpush1.bf16.msra.mxu0 0
    %686 = vmatprep.subr.bf16.mxu0 0
    %687 = vmatpush1.bf16.msra.mxu0 0
    %688 = vmatprep.subr.bf16.mxu0 0
    %689 = vmatpush1.bf16.msra.mxu0 0
    %690 = vmatprep.subr.bf16.mxu0 0
    %691 = vmatpush1.bf16.msra.mxu0 0
    %692 = vmatprep.subr.bf16.mxu0 0
    %693 = vmatpush1.bf16.msra.mxu0 0
    %694 = vmatprep.subr.bf16.mxu0 0
    %695 = vmatpush1.bf16.msra.mxu0 0
    %696 = vmatprep.subr.bf16.mxu0 0
    %697 = vmatpush1.bf16.msra.mxu0 0
    %698 = vmatprep.subr.bf16.mxu0 0
    %699 = vmatpush1.bf16.msra.mxu0 0
    %700 = vmatprep.subr.bf16.mxu0 0
    %701 = vmatpush1.bf16.msra.mxu0 0
    %702 = vmatprep.subr.bf16.mxu0 0
    %703 = vmatpush1.bf16.msra.mxu0 0
    %704 = vmatprep.subr.bf16.mxu0 0
    %705 = vmatpush1.bf16.msra.mxu0 0
    %706 = vmatprep.subr.bf16.mxu0 0
    %707 = vmatpush1.bf16.msra.mxu0 0
    %708 = vmatprep.mubr.bf16.mxu0 0
    %709 = vmatmul.mubr.bf16.gmra.mrb[0].mxu0 %v674
    %v710 = vpop.f32.mrb[0].mxu0
    %v711 = vadd.f32 0.0, %v710
    %v712 = vpop.f32.mrb[0].mxu0
    %v713 = vadd.f32 0.0, %v712
    %v714 = vpop.f32.mrb[0].mxu0
    %v715 = vadd.f32 0.0, %v714
    %v716 = vpop.f32.mrb[0].mxu0
    %v717 = vadd.f32 0.0, %v716
    %718 = vdwg.mxu0
    %719 = vmatprep.subr.bf16.mxu0 0
    %720 = vmatpush1.bf16.msra.mxu0 %v663
    %721 = vmatprep.subr.bf16.mxu0 0
    %722 = vmatpush1.bf16.msra.mxu0 %v666
    %723 = vmatprep.subr.bf16.mxu0 0
    %724 = vmatpush1.bf16.msra.mxu0 0
    %725 = vmatprep.subr.bf16.mxu0 0
    %726 = vmatpush1.bf16.msra.mxu0 0
    %727 = vmatprep.subr.bf16.mxu0 0
    %728 = vmatpush1.bf16.msra.mxu0 0
    %729 = vmatprep.subr.bf16.mxu0 0
    %730 = vmatpush1.bf16.msra.mxu0 0
    %731 = vmatprep.subr.bf16.mxu0 0
    %732 = vmatpush1.bf16.msra.mxu0 0
    %733 = vmatprep.subr.bf16.mxu0 0
    %734 = vmatpush1.bf16.msra.mxu0 0
    %735 = vmatprep.subr.bf16.mxu0 0
    %736 = vmatpush1.bf16.msra.mxu0 0
    %737 = vmatprep.subr.bf16.mxu0 0
    %738 = vmatpush1.bf16.msra.mxu0 0
    %739 = vmatprep.subr.bf16.mxu0 0
    %740 = vmatpush1.bf16.msra.mxu0 0
    %741 = vmatprep.subr.bf16.mxu0 0
    %742 = vmatpush1.bf16.msra.mxu0 0
    %743 = vmatprep.subr.bf16.mxu0 0
    %744 = vmatpush1.bf16.msra.mxu0 0
    %745 = vmatprep.subr.bf16.mxu0 0
    %746 = vmatpush1.bf16.msra.mxu0 0
    %747 = vmatprep.subr.bf16.mxu0 0
    %748 = vmatpush1.bf16.msra.mxu0 0
    %749 = vmatprep.subr.bf16.mxu0 0
    %750 = vmatpush1.bf16.msra.mxu0 0
    %751 = vmatprep.mubr.bf16.mxu0 0
    %752 = vmatmul.mubr.bf16.gmra.mrb[0].mxu0 %v674
    %v753 = vpop.f32.mrb[0].mxu0
    %v754 = vadd.f32 0.0, %v753
    %v755 = vpop.f32.mrb[0].mxu0
    %v756 = vpop.f32.mrb[0].mxu0
    %v757 = vadd.f32 0.0, %v756
    %v758 = vpop.f32.mrb[0].mxu0
    %759 = vdwg.mxu0
    %v760 = vadd.f32 %v617, %v711
    %v761 = vadd.f32 %v618, %v713
    %v762 = vadd.f32 %v619, %v754
    %v763 = vadd.f32 %v620, %v715
    %v764 = vadd.f32 %v621, %v717
    %v765 = vadd.f32 %v622, %v757
    %v766 = vlaneseq
    %v767 = vshrl.u32 %v766, 7
    %v768 = vlaneseq
    %v769 = vand.u32 %v768, 127
    %v770 = vadd.s32 %v769, 128
    %v771 = vadd.s32 %v769, 256
    %vm772 = vcmp.ge.s32.totalorder %v769, 128
    %vm773 = vcmp.ge.s32.totalorder %v770, 128
    %vm774 = vcmp.ge.s32.totalorder %v771, 128
    %v775 = vsel %vm772, 5, 6
    %v776 = vsel %vm773, 5, 6
    %v777 = vsel %vm774, 5, 6
    %vm778 = vcmp.ge.s32.totalorder %v769, 256
    %vm779 = vcmp.ge.s32.totalorder %v770, 256
    %vm780 = vcmp.ge.s32.totalorder %v771, 256
    %v781 = vsel %vm778, 4, %v775
    %v782 = vsel %vm779, 4, %v776
    %v783 = vsel %vm780, 4, %v777
    %vm784 = vcmp.lt.s32.totalorder %v767, %v781
    %vm785 = vcmp.lt.s32.totalorder %v767, %v782
    %vm786 = vcmp.lt.s32.totalorder %v767, %v783
    %v787 = vsel %vm784, 1, 0
    %v788 = vsel %vm785, 1, 0
    %v789 = vsel %vm786, 1, 0
    %vm790 = vcmp.eq.s32.totalorder %v787, 1
    %vm791 = vcmp.eq.s32.totalorder %v788, 1
    %vm792 = vcmp.eq.s32.totalorder %v789, 1
    %v793 = vsel %vm790, %v760, -1e+30
    %v794 = vsel %vm791, %v761, -1e+30
    %v795 = vsel %vm792, %v762, -1e+30
    %v796 = vsel %vm790, %v763, -1e+30
    %v797 = vsel %vm791, %v764, -1e+30
    %v798 = vsel %vm792, %v765, -1e+30
    %v799 = vrot.slane %v793, 4
    %v800 = vmax.f32 %v793, %v799
    %v801 = vrot.slane %v800, 2
    %v802 = vmax.f32 %v800, %v801
    %v803 = vrot.slane %v802, 1
    %v804 = vmax.f32 %v802, %v803
    %v805 = vrot.slane %v794, 4
    %v806 = vmax.f32 %v794, %v805
    %v807 = vrot.slane %v806, 2
    %v808 = vmax.f32 %v806, %v807
    %v809 = vrot.slane %v808, 1
    %v810 = vmax.f32 %v808, %v809
    %v811 = vrot.slane %v795, 4
    %v812 = vmax.f32 %v795, %v811
    %v813 = vrot.slane %v812, 2
    %v814 = vmax.f32 %v812, %v813
    %v815 = vrot.slane %v814, 1
    %v816 = vmax.f32 %v814, %v815
    %v817 = vrot.slane %v796, 4
    %v818 = vmax.f32 %v796, %v817
    %v819 = vrot.slane %v818, 2
    %v820 = vmax.f32 %v818, %v819
    %v821 = vrot.slane %v820, 1
    %v822 = vmax.f32 %v820, %v821
    %v823 = vrot.slane %v797, 4
    %v824 = vmax.f32 %v797, %v823
    %v825 = vrot.slane %v824, 2
    %v826 = vmax.f32 %v824, %v825
    %v827 = vrot.slane %v826, 1
    %v828 = vmax.f32 %v826, %v827
    %v829 = vrot.slane %v798, 4
    %v830 = vmax.f32 %v798, %v829
    %v831 = vrot.slane %v830, 2
    %v832 = vmax.f32 %v830, %v831
    %v833 = vrot.slane %v832, 1
    %v834 = vmax.f32 %v832, %v833
    %v835 = vld [vmem:[%s2] sm:$0x7]
    %v837 = vlaneseq
    %v838 = vshrl.u32 %v837, 7
    %v839 = vsub.s32 0, %v838
    %v840 = vrot.slane %v835, %v839
    %v841 = vlaneseq
    %v842 = vshrl.u32 %v841, 7
    %v843 = vsub.s32 1, %v842
    %v844 = vrot.slane %v835, %v843
    %v845 = vlaneseq
    %v846 = vshrl.u32 %v845, 7
    %v847 = vsub.s32 2, %v846
    %v848 = vrot.slane %v835, %v847
    %v852 = vadd.f32 %v804, %v840
    %v853 = vadd.f32 %v810, %v844
    %v854 = vadd.f32 %v816, %v848
    %v855 = vadd.f32 %v822, %v840
    %v856 = vadd.f32 %v828, %v844
    %v857 = vadd.f32 %v834, %v848
    %v858 = vmax.f32 %v852, 0.0
    %v859 = vmax.f32 %v853, 0.0
    %v860 = vmax.f32 %v854, 0.0
    %v861 = vmax.f32 %v855, 0.0
    %v862 = vmax.f32 %v856, 0.0
    %v863 = vmax.f32 %v857, 0.0
    %v864 = vld [vmem:[#allocation7] sm:$0xff]
    %v865 = vld [vmem:[#allocation7 + $0x8] sm:$0xff]
    %v866 = vld [vmem:[#allocation7 + $0x10] sm:$0xff]
    %v867 = vld [vmem:[#allocation7 + $0x18] sm:$0xff]
    %v868 = vld [vmem:[#allocation7 + $0x20] sm:$0xff]
    %v869 = vld [vmem:[#allocation7 + $0x28] sm:$0xff]
    %v870 = vld [vmem:[#allocation7 + $0x30] sm:$0xff]
    %v871 = vld [vmem:[#allocation7 + $0x38] sm:$0xff]
    %v872 = vld [vmem:[#allocation7 + $0x40] sm:$0xff]
    %v873 = vld [vmem:[#allocation7 + $0x48] sm:$0xff]
    %v874 = vld [vmem:[#allocation7 + $0x50] sm:$0xff]
    %v875 = vld [vmem:[#allocation7 + $0x58] sm:$0xff]
    %v876 = vld [vmem:[#allocation7 + $0x60] sm:$0xff]
    %v877 = vld [vmem:[#allocation7 + $0x68] sm:$0xff]
    %v878 = vld [vmem:[#allocation7 + $0x70] sm:$0xff]
    %v879 = vld [vmem:[#allocation7 + $0x78] sm:$0xff]
    %v880 = vld [vmem:[#allocation7 + $0x80] sm:$0xff]
    %v881 = vld [vmem:[#allocation7 + $0x88] sm:$0xff]
    %v882 = vld [vmem:[#allocation7 + $0x90] sm:$0xff]
    %v883 = vld [vmem:[#allocation7 + $0x98] sm:$0xff]
    %v884 = vld [vmem:[#allocation7 + $0xa0] sm:$0xff]
    %v885 = vld [vmem:[#allocation7 + $0xa8] sm:$0xff]
    %v886 = vld [vmem:[#allocation7 + $0xb0] sm:$0xff]
    %v887 = vld [vmem:[#allocation7 + $0xb8] sm:$0xff]
    %v888 = vld [vmem:[#allocation7 + $0xc0] sm:$0xff]
    %v889 = vld [vmem:[#allocation7 + $0xc8] sm:$0xff]
    %v890 = vld [vmem:[#allocation7 + $0xd0] sm:$0xff]
    %v891 = vld [vmem:[#allocation7 + $0xd8] sm:$0xff]
    %v892 = vld [vmem:[#allocation7 + $0xe0] sm:$0xff]
    %v893 = vld [vmem:[#allocation7 + $0xe8] sm:$0xff]
    %v894 = vld [vmem:[#allocation7 + $0xf0] sm:$0xff]
    %v895 = vld [vmem:[#allocation7 + $0xf8] sm:$0xff]
    %v896 = vld [vmem:[#allocation7 + $0x100] sm:$0xff]
    %v897 = vld [vmem:[#allocation7 + $0x108] sm:$0xff]
    %v898 = vld [vmem:[#allocation7 + $0x110] sm:$0xff]
    %v899 = vld [vmem:[#allocation7 + $0x118] sm:$0xff]
    %v900 = vld [vmem:[#allocation7 + $0x120] sm:$0xff]
    %v901 = vld [vmem:[#allocation7 + $0x128] sm:$0xff]
    %v902 = vld [vmem:[#allocation7 + $0x130] sm:$0xff]
    %v903 = vld [vmem:[#allocation7 + $0x138] sm:$0xff]
    %v904 = vld [vmem:[#allocation7 + $0x140] sm:$0xff]
    %v905 = vld [vmem:[#allocation7 + $0x148] sm:$0xff]
    %v906 = vld [vmem:[#allocation7 + $0x150] sm:$0xff]
    %v907 = vld [vmem:[#allocation7 + $0x158] sm:$0xff]
    %v908 = vld [vmem:[#allocation7 + $0x160] sm:$0xff]
    %v909 = vld [vmem:[#allocation7 + $0x168] sm:$0xff]
    %v910 = vld [vmem:[#allocation7 + $0x170] sm:$0xff]
    %v911 = vld [vmem:[#allocation7 + $0x178] sm:$0xff]
    %v912 = vld [vmem:[%s4] sm:$0x1]
    %v914 = vlaneseq
    %v915 = vshrl.u32 %v914, 7
    %v916 = vsub.s32 0, %v915
    %v917 = vrot.slane %v912, %v916
    %v925 = vrot.slane %v861, 7
    %vm926 = vcmask 1041409
    %v927 = vsel %vm926, %v925, %v858
    %v928 = vrot.slane %v862, 7
    %v929 = vsel %vm926, %v928, %v859
    %v930 = vrot.slane %v863, 7
    %v931 = vsel %vm926, %v930, %v860
    %935 = vmatprep.subr.mxu0 0.0
    %936 = vmatpush1.msra.mxu0 %v864
    %937 = vmatprep.subr.mxu0 0.0
    %938 = vmatpush1.msra.mxu0 %v865
    %939 = vmatprep.subr.mxu0 0.0
    %940 = vmatpush1.msra.mxu0 %v866
    %941 = vmatprep.subr.mxu0 0.0
    %942 = vmatpush1.msra.mxu0 %v867
    %943 = vmatprep.subr.mxu0 0.0
    %944 = vmatpush1.msra.mxu0 %v868
    %945 = vmatprep.subr.mxu0 0.0
    %946 = vmatpush1.msra.mxu0 %v869
    %947 = vmatprep.subr.mxu0 0.0
    %948 = vmatpush1.msra.mxu0 %v870
    %949 = vmatprep.subr.mxu0 0.0
    %950 = vmatpush1.msra.mxu0 %v871
    %951 = vmatprep.subr.mxu0 0.0
    %952 = vmatpush1.msra.mxu0 %v872
    %953 = vmatprep.subr.mxu0 0.0
    %954 = vmatpush1.msra.mxu0 %v873
    %955 = vmatprep.subr.mxu0 0.0
    %956 = vmatpush1.msra.mxu0 %v874
    %957 = vmatprep.subr.mxu0 0.0
    %958 = vmatpush1.msra.mxu0 %v875
    %959 = vmatprep.subr.mxu0 0.0
    %960 = vmatpush1.msra.mxu0 %v876
    %961 = vmatprep.subr.mxu0 0.0
    %962 = vmatpush1.msra.mxu0 %v877
    %963 = vmatprep.subr.mxu0 0.0
    %964 = vmatpush1.msra.mxu0 %v878
    %965 = vmatprep.subr.mxu0 0.0
    %966 = vmatpush1.msra.mxu0 %v879
    %967 = vmatprep.subr.mxu0 0.0
    %968 = vmatpush1.msra.mxu0 %v880
    %969 = vmatprep.subr.mxu0 0.0
    %970 = vmatpush1.msra.mxu0 %v881
    %971 = vmatprep.subr.mxu0 0.0
    %972 = vmatpush1.msra.mxu0 %v882
    %973 = vmatprep.subr.mxu0 0.0
    %974 = vmatpush1.msra.mxu0 %v883
    %975 = vmatprep.subr.mxu0 0.0
    %976 = vmatpush1.msra.mxu0 %v884
    %977 = vmatprep.subr.mxu0 0.0
    %978 = vmatpush1.msra.mxu0 %v885
    %979 = vmatprep.subr.mxu0 0.0
    %980 = vmatpush1.msra.mxu0 %v886
    %981 = vmatprep.subr.mxu0 0.0
    %982 = vmatpush1.msra.mxu0 %v887
    %983 = vmatprep.subr.mxu0 0.0
    %984 = vmatpush1.msra.mxu0 %v888
    %985 = vmatprep.subr.mxu0 0.0
    %986 = vmatpush1.msra.mxu0 %v889
    %987 = vmatprep.subr.mxu0 0.0
    %988 = vmatpush1.msra.mxu0 %v890
    %989 = vmatprep.subr.mxu0 0.0
    %990 = vmatpush1.msra.mxu0 %v891
    %991 = vmatprep.subr.mxu0 0.0
    %992 = vmatpush1.msra.mxu0 %v892
    %993 = vmatprep.subr.mxu0 0.0
    %994 = vmatpush1.msra.mxu0 %v893
    %995 = vmatprep.subr.mxu0 0.0
    %996 = vmatpush1.msra.mxu0 %v894
    %997 = vmatprep.subr.mxu0 0.0
    %998 = vmatpush1.msra.mxu0 %v895
    %999 = vmatprep.mubr.f32.mxu0 %v929
    %1000 = vmatmul.mubr.f32.gmra.mrb[0].mxu0 %v927
    %v1001 = vpop.f32.mrb[0].mxu0
    %v1002 = vadd.f32 %v917, %v1001
    %v1003 = vpop.f32.mrb[0].mxu0
    %1004 = vdwg.mxu0
    %1005 = vmatprep.subr.mxu0 0.0
    %1006 = vmatpush1.msra.mxu0 %v896
    %1007 = vmatprep.subr.mxu0 0.0
    %1008 = vmatpush1.msra.mxu0 %v897
    %1009 = vmatprep.subr.mxu0 0.0
    %1010 = vmatpush1.msra.mxu0 %v898
    %1011 = vmatprep.subr.mxu0 0.0
    %1012 = vmatpush1.msra.mxu0 %v899
    %1013 = vmatprep.subr.mxu0 0.0
    %1014 = vmatpush1.msra.mxu0 %v900
    %1015 = vmatprep.subr.mxu0 0.0
    %1016 = vmatpush1.msra.mxu0 %v901
    %1017 = vmatprep.subr.mxu0 0.0
    %1018 = vmatpush1.msra.mxu0 %v902
    %1019 = vmatprep.subr.mxu0 0.0
    %1020 = vmatpush1.msra.mxu0 %v903
    %1021 = vmatprep.subr.mxu0 0.0
    %1022 = vmatpush1.msra.mxu0 %v904
    %1023 = vmatprep.subr.mxu0 0.0
    %1024 = vmatpush1.msra.mxu0 %v905
    %1025 = vmatprep.subr.mxu0 0.0
    %1026 = vmatpush1.msra.mxu0 %v906
    %1027 = vmatprep.subr.mxu0 0.0
    %1028 = vmatpush1.msra.mxu0 %v907
    %1029 = vmatprep.subr.mxu0 0.0
    %1030 = vmatpush1.msra.mxu0 %v908
    %1031 = vmatprep.subr.mxu0 0.0
    %1032 = vmatpush1.msra.mxu0 %v909
    %1033 = vmatprep.subr.mxu0 0.0
    %1034 = vmatpush1.msra.mxu0 %v910
    %1035 = vmatprep.subr.mxu0 0.0
    %1036 = vmatpush1.msra.mxu0 %v911
    %1037 = vmatprep.subr.mxu0 0.0
    %1038 = vmatpush1.msra.mxu0 0.0
    %1039 = vmatprep.subr.mxu0 0.0
    %1040 = vmatpush1.msra.mxu0 0.0
    %1041 = vmatprep.subr.mxu0 0.0
    %1042 = vmatpush1.msra.mxu0 0.0
    %1043 = vmatprep.subr.mxu0 0.0
    %1044 = vmatpush1.msra.mxu0 0.0
    %1045 = vmatprep.subr.mxu0 0.0
    %1046 = vmatpush1.msra.mxu0 0.0
    %1047 = vmatprep.subr.mxu0 0.0
    %1048 = vmatpush1.msra.mxu0 0.0
    %1049 = vmatprep.subr.mxu0 0.0
    %1050 = vmatpush1.msra.mxu0 0.0
    %1051 = vmatprep.subr.mxu0 0.0
    %1052 = vmatpush1.msra.mxu0 0.0
    %1053 = vmatprep.subr.mxu0 0.0
    %1054 = vmatpush1.msra.mxu0 0.0
    %1055 = vmatprep.subr.mxu0 0.0
    %1056 = vmatpush1.msra.mxu0 0.0
    %1057 = vmatprep.subr.mxu0 0.0
    %1058 = vmatpush1.msra.mxu0 0.0
    %1059 = vmatprep.subr.mxu0 0.0
    %1060 = vmatpush1.msra.mxu0 0.0
    %1061 = vmatprep.subr.mxu0 0.0
    %1062 = vmatpush1.msra.mxu0 0.0
    %1063 = vmatprep.subr.mxu0 0.0
    %1064 = vmatpush1.msra.mxu0 0.0
    %1065 = vmatprep.subr.mxu0 0.0
    %1066 = vmatpush1.msra.mxu0 0.0
    %1067 = vmatprep.subr.mxu0 0.0
    %1068 = vmatpush1.msra.mxu0 0.0
    %1069 = vmatprep.mubr.f32.mxu0 0.0
    %1070 = vmatmul.mubr.f32.gmra.mrb[0].mxu0 %v931
    %v1071 = vpop.f32.mrb[0].mxu0
    %v1072 = vadd.f32 %v1002, %v1071
    %v1073 = vpop.f32.mrb[0].mxu0
    %1074 = vdwg.mxu0
    %v1075 = vxor.u32 %v1072, 2147483648
    %v1076 = vmul.f32 %v1075, 1.442695
    %v1077 = vpow.pop %v1076
    %v1078 = vadd.f32 %v1077, 1.0
    %v1079 = vrcp.pop %v1078
    %v1080 = vmul.f32 1.0, %v1079
    %1081 = vst [vmem:[#allocation8] sm:$0x3] %v1080
    // Predicated region
    $region34: #{tpu_custom_call.1} parent=1 // pred_check
      _
    $region35: #{tpu_custom_call.1} parent=1 // pred_check_branch
      %1083 = sbr.rel (0) target = $region37
    $region36: #{tpu_custom_call.1} parent=1 // pred_region
      %s1085 = ssub.s32 32, 32
      %1086 = vsyncadd [#allocation4], %s1085
      %s1088 = sshll.u32 [#allocation8], 4
      %s1089 = int_to_ptr.vmem [resolvable:$true] %s1088
      %1091 = dma.vmem_to_hbm [thread:$0]  %s1089, 32, %s5, [#allocation4]
    $region37: #{tpu_custom_call.1} parent=1 // pred_fallthru
      _
    // Predicated region
    $region38: #{tpu_custom_call.1} parent=1 // pred_check
      _
    $region39: #{tpu_custom_call.1} parent=1 // pred_check_branch
      %1093 = sbr.rel (0) target = $region41
    $region40: #{tpu_custom_call.1} parent=1 // pred_region
      %1094 = dma.done [#allocation4], 32
    $region41: #{tpu_custom_call.1} parent=1 // pred_fallthru
      _
    %1095 = vsyncpa [#allocation3], 1
    %1096 = vsyncpa [#allocation6], 1
    %1097 = vsyncpa [#allocation4], 1

</llo_original>
